<compile_context>
chip_gen: v5e
topology: v5e:2x2
jax: 0.10.0
libtpu: 0.0.40
codegen_flags: <defaults>
</compile_context>

<pallas_src>
import functools

import jax
import jax.numpy as jnp
import numpy as np
from jax import lax
from jax.experimental import pallas as pl
from jax.experimental.pallas import tpu as pltpu


def _round_up(x, m):
    return ((x + m - 1) // m) * m


# ----------------------------------------------------------------------------
# Kernel: all B*C rows in one invocation (no grid).
# ----------------------------------------------------------------------------
def cbow_flat_kernel(idx_ref, emb_ref, wt_ref, b_ref, out_ref, *,
                     num_windows, context_len):
    """CBOW forward for num_windows context windows, flattened.

    idx_ref : (R, 1)       int32  flattened context-word indices (R = B*C), VMEM
    emb_ref : (Vp128, E)   f32    zero-row-padded embedding table, VMEM
    wt_ref  : (E, Vp)      f32    pre-transposed, lane-padded linear weight
    b_ref   : (1, Vp)      f32    lane-padded bias
    out_ref : (R, Vp)      f32    per-row log-probs (softmax over the C rows
                                  of each window == PyTorch dim=1 of (1,C,V))
    """
    R = idx_ref.shape[0]
    v_onehot = emb_ref.shape[0]
    B, C = num_windows, context_len

    # --- Embedding gather as one one-hot MXU pass (no serialized row slices). ---
    ids = idx_ref[...]                                                  # (R, 1)
    lanes = lax.broadcasted_iota(jnp.int32, (R, v_onehot), 1)           # (R, Vp128)
    onehot = (ids == lanes).astype(jnp.float32)                         # (R, Vp128)
    embeds = jnp.dot(onehot, emb_ref[...],
                     preferred_element_type=jnp.float32)                # (R, E)

    # --- Linear layer: ONE matmul for all B*C rows, V on the lane axis. ---
    logits = jnp.dot(embeds, wt_ref[...],
                     preferred_element_type=jnp.float32) + b_ref[...]   # (R, Vp)

    # --- log_softmax over the CONTEXT axis of each window (static unrolled). ---
    outs = []
    for w in range(B):
        blk = logits[w * C:(w + 1) * C, :]                              # (C, Vp)
        m = jnp.max(blk, axis=0, keepdims=True)
        z = blk - m
        lse = jnp.log(jnp.sum(jnp.exp(z), axis=0, keepdims=True))
        outs.append(z - lse)
    result = outs[0] if B == 1 else jnp.concatenate(outs, axis=0)       # (R, Vp)

    # Single lane/sublane-dense store of the whole slab (full vregs, no vst.msk).
    out_ref[...] = result


# ----------------------------------------------------------------------------
# One-time parameter prep (hoisted out of the per-call path).
# ----------------------------------------------------------------------------
def init_cbow_params(emb_weight, lin_weight, lin_bias):
    """Pads/transposes the model parameters once:
       * embedding table zero-padded to 128 rows (one-hot contraction dim)
       * linear weight transposed to (E, V) and zero-padded to Vp lanes
       * bias zero-padded to (1, Vp)
    """
    V, E = emb_weight.shape
    v_onehot = _round_up(V, 128)
    v_pad = _round_up(V, 128)
    emb_pad = jnp.zeros((v_onehot, E), jnp.float32).at[:V, :].set(
        emb_weight.astype(jnp.float32))
    w_t = jnp.zeros((E, v_pad), jnp.float32).at[:, :V].set(
        lin_weight.astype(jnp.float32).T)
    b_pad = jnp.zeros((1, v_pad), jnp.float32).at[0, :V].set(
        lin_bias.astype(jnp.float32))
    return {
        "emb": emb_pad, "w_t": w_t, "bias": b_pad,
        "vocab_size": V, "embed_dim": E,
    }


# ----------------------------------------------------------------------------
# Wrappers
# ----------------------------------------------------------------------------
def cbow_forward_batched(idx_batch, params):
    """B context windows in ONE kernel invocation. idx_batch: (B, C) int.
    Returns (B, C, V) f32 log-probs (softmax over the C axis of each window)."""
    B, C = idx_batch.shape
    V, E = params["vocab_size"], params["embed_dim"]
    emb, w_t, b = params["emb"], params["w_t"], params["bias"]
    v_onehot = emb.shape[0]
    v_pad = w_t.shape[1]
    R = B * C

    # Clip keeps the one-hot/gather well-defined even for bad indices.
    idx = jnp.clip(idx_batch.astype(jnp.int32), 0, V - 1).reshape(R, 1)

    kernel = functools.partial(cbow_flat_kernel,
                               num_windows=B, context_len=C)
    cost = pl.CostEstimate(
        flops=2 * R * v_onehot * E + 2 * R * E * v_pad,
        transcendentals=R * v_pad + B * v_pad,
        bytes_accessed=4 * (R + v_onehot * E + E * v_pad + v_pad + R * v_pad),
    )

    out = pl.pallas_call(
        kernel,
        out_shape=jax.ShapeDtypeStruct((R, v_pad), jnp.float32),
        in_specs=[
            pl.BlockSpec(memory_space=pltpu.MemorySpace.VMEM),   # indices (R,1)
            pl.BlockSpec(memory_space=pltpu.MemorySpace.VMEM),   # emb table (row-padded)
            pl.BlockSpec(memory_space=pltpu.MemorySpace.VMEM),   # W^T (lane-padded)
            pl.BlockSpec(memory_space=pltpu.MemorySpace.VMEM),   # bias (lane-padded)
        ],
        out_specs=pl.BlockSpec(memory_space=pltpu.MemorySpace.VMEM),
        cost_estimate=cost,
    )(idx, emb, w_t, b)

    # Layout glue (slice off padded vocab lanes + per-window reshape) stays outside.
    return out[:, :V].reshape(B, C, V)


def cbow_forward(indices, params):
    """Single context window (PyTorch CBOW.forward). indices: (C,) int.
    Returns (1, C, V) f32 log-probs."""
    # inputs.view(1, -1) in the PyTorch module == one window of the batched path.
    return cbow_forward_batched(indices.reshape(1, -1), params)


# ----------------------------------------------------------------------------
# Plain-JAX reference (matches PyTorch CBOW.forward exactly)
# ----------------------------------------------------------------------------
def cbow_reference(indices, emb_weight, lin_weight, lin_bias):
    embeds = emb_weight[indices][None, :, :]                          # (1, C, E)
    out = jnp.einsum("bce,ve->bcv", embeds, lin_weight) + lin_bias    # (1, C, V)
    return jax.nn.log_softmax(out, axis=1)                            # context axis


if __name__ == "__main__":
    # Shapes from the module's usage: CBOW(49, 70), context window of 4 words.
    VOCAB_SIZE = 49
    EMBED_DIM = 70
    CONTEXT_LEN = 4

    key = jax.random.PRNGKey(0)
    k1, k2, k3, k4, k5 = jax.random.split(key, 5)

    emb_weight = jax.random.normal(k1, (VOCAB_SIZE, EMBED_DIM), jnp.float32)
    bound = 1.0 / np.sqrt(EMBED_DIM)
    lin_weight = jax.random.uniform(k2, (VOCAB_SIZE, EMBED_DIM), jnp.float32,
                                    minval=-bound, maxval=bound)
    lin_bias = jax.random.uniform(k3, (VOCAB_SIZE,), jnp.float32,
                                  minval=-bound, maxval=bound)

    # Parameter prep happens ONCE, outside the per-call path.
    params = init_cbow_params(emb_weight, lin_weight, lin_bias)

    # Single context window (what make_context_vector produces).
    indices = jax.random.randint(k4, (CONTEXT_LEN,), 0, VOCAB_SIZE, jnp.int32)
    log_probs = jax.block_until_ready(cbow_forward(indices, params))
    ref = cbow_reference(indices, emb_weight, lin_weight, lin_bias)
    np.testing.assert_allclose(np.asarray(log_probs), np.asarray(ref),
                               rtol=1e-5, atol=1e-5)
    assert log_probs.shape == (1, CONTEXT_LEN, VOCAB_SIZE)

    # Batched variant: B windows flattened into ONE kernel invocation.
    B = 8
    idx_batch = jax.random.randint(k5, (B, CONTEXT_LEN), 0, VOCAB_SIZE, jnp.int32)
    log_probs_b = jax.block_until_ready(cbow_forward_batched(idx_batch, params))
    ref_b = jnp.stack([cbow_reference(idx_batch[i], emb_weight,
                                      lin_weight, lin_bias)[0]
                       for i in range(B)])
    np.testing.assert_allclose(np.asarray(log_probs_b), np.asarray(ref_b),
                               rtol=1e-5, atol=1e-5)

    print("KERNEL_OK")
</pallas_src>

<mosaic_0001>
module attributes {stable_mosaic.version = 11 : i64} {
  func.func @cbow_flat_kernel(%arg0: memref<4x1xi32, #tpu.memory_space<vmem>>, %arg1: memref<128x70xf32, #tpu.memory_space<vmem>>, %arg2: memref<70x128xf32, #tpu.memory_space<vmem>>, %arg3: memref<1x128xf32, #tpu.memory_space<vmem>>, %arg4: memref<4x128xf32, #tpu.memory_space<vmem>>) attributes {dimension_semantics = [], scalar_prefetch = 0 : i64, scratch_operands = 0 : i64, tpu.core_type = #tpu.core_type<tc>} {
    %c0 = arith.constant 0 : index
    %c0_0 = arith.constant 0 : index
    %0 = vector.load %arg0[%c0, %c0_0] : memref<4x1xi32, #tpu.memory_space<vmem>>, vector<4x1xi32>
    %1 = tpu.iota {dimensions = array<i32: 1>} : vector<4x128xi32>
    %2 = vector.broadcast %0 : vector<4x1xi32> to vector<4x128xi32>
    %3 = arith.cmpi eq, %2, %1 : vector<4x128xi32>
    %4 = arith.extui %3 : vector<4x128xi1> to vector<4x128xi32>
    %5 = arith.sitofp %4 : vector<4x128xi32> to vector<4x128xf32>
    %c0_1 = arith.constant 0 : index
    %c0_2 = arith.constant 0 : index
    %6 = vector.load %arg1[%c0_1, %c0_2] : memref<128x70xf32, #tpu.memory_space<vmem>>, vector<128x70xf32>
    %cst = arith.constant dense<0.000000e+00> : vector<4x70xf32>
    %7 = tpu.matmul %5, %6, %cst {dimension_numbers = #tpu.dot_dimension_numbers<[1], [0], [0], [1], [0, 0, 1, 1], [], []>} : vector<4x128xf32>, vector<128x70xf32>, vector<4x70xf32> -> vector<4x70xf32>
    %c0_3 = arith.constant 0 : index
    %c0_4 = arith.constant 0 : index
    %8 = vector.load %arg2[%c0_3, %c0_4] : memref<70x128xf32, #tpu.memory_space<vmem>>, vector<70x128xf32>
    %cst_5 = arith.constant dense<0.000000e+00> : vector<4x128xf32>
    %9 = tpu.matmul %7, %8, %cst_5 {dimension_numbers = #tpu.dot_dimension_numbers<[1], [0], [0], [1], [0, 0, 1, 1], [], []>} : vector<4x70xf32>, vector<70x128xf32>, vector<4x128xf32> -> vector<4x128xf32>
    %c0_6 = arith.constant 0 : index
    %c0_7 = arith.constant 0 : index
    %10 = vector.load %arg3[%c0_6, %c0_7] : memref<1x128xf32, #tpu.memory_space<vmem>>, vector<1x128xf32>
    %11 = vector.broadcast %10 : vector<1x128xf32> to vector<4x128xf32>
    %12 = arith.addf %9, %11 : vector<4x128xf32>
    %cst_8 = arith.constant dense<0xFF800000> : vector<128xf32>
    %13 = vector.multi_reduction <maximumf>, %12, %cst_8 [0] : vector<4x128xf32> to vector<128xf32>
    %14 = vector.shape_cast %13 : vector<128xf32> to vector<1x128xf32>
    %15 = vector.broadcast %14 : vector<1x128xf32> to vector<4x128xf32>
    %16 = arith.subf %12, %15 : vector<4x128xf32>
    %17 = math.exp %16 : vector<4x128xf32>
    %cst_9 = arith.constant dense<0.000000e+00> : vector<128xf32>
    %18 = vector.multi_reduction <add>, %17, %cst_9 [0] : vector<4x128xf32> to vector<128xf32>
    %19 = vector.shape_cast %18 : vector<128xf32> to vector<1x128xf32>
    %20 = math.log %19 : vector<1x128xf32>
    %21 = vector.broadcast %20 : vector<1x128xf32> to vector<4x128xf32>
    %22 = arith.subf %16, %21 : vector<4x128xf32>
    %c0_10 = arith.constant 0 : index
    %c0_11 = arith.constant 0 : index
    %23 = vector.load %arg4[%c0_10, %c0_11] : memref<4x128xf32, #tpu.memory_space<vmem>>, vector<4x128xf32>
    tpu.vector_store %arg4[%c0_10, %c0_11], %22 {strides = array<i32>} : memref<4x128xf32, #tpu.memory_space<vmem>>, vector<4x128xf32>,
    return
  }
}

</mosaic_0001>

<llo_original>
// kernel: tpu_custom_call.1
$region0: #{tpu_custom_call.1}
  #allocation0 [shape = 'u32[]', space=smem, size = 0x4, offset = 0x4, fixed_abs, tag = 'smem constant byte address 0x4 - core index']
  #allocation1 [shape = 'u32[72,128]{1,0:T(1,128)}', space=vmem, size = 0x9000, scoped, tag = 'internal scratch']
  %s0 = inlined_call_operand.vmem [shape: s32[4,1], index: 0, kind: input, shape index: {}]
  %s1 = inlined_call_operand.vmem [shape: f32[128,70], index: 1, kind: input, shape index: {}]
  %s2 = inlined_call_operand.vmem [shape: f32[70,128], index: 2, kind: input, shape index: {}]
  %s3 = inlined_call_operand.vmem [shape: f32[1,128], index: 3, kind: input, shape index: {}]
  %s4 = inlined_call_operand.hbm [shape: f32[4,128], index: 4, kind: output, shape index: {}]
  %s5 = sld [smem:[#allocation0]]
  $region26: #{tpu_custom_call.1} parent=0
    _
  %s7 = ssub.s32 1, %s5
  %s8 = scalar_select 0, %s7, %s5
  $region1: #{tpu_custom_call.1} parent=0
    #allocation2 [shape = 'u8[2048]{0}', space=vmem, size = 0x800, scoped, tag = 'output window, operand 0, single buffered']
    #allocation3 [shape = 's32[1]{0}', space=sflag, size = 0x4, scoped, tag = 'scoped memory for tpu_custom_call.1']
    %9 = vsyncpa [#allocation3], 0
    // Predicated region
    $region2: #{tpu_custom_call.1} parent=1 // pred_check
      _
    $region3: #{tpu_custom_call.1} parent=1 // pred_check_branch
      %11 = sbr.rel (0) target = $region5
    $region4: #{tpu_custom_call.1} parent=1 // pred_region
      _
    $region5: #{tpu_custom_call.1} parent=1 // pred_fallthru
      _
    // Predicated region
    $region6: #{tpu_custom_call.1} parent=1 // pred_check
      _
    $region7: #{tpu_custom_call.1} parent=1 // pred_check_branch
      %13 = sbr.rel (0) target = $region9
    $region8: #{tpu_custom_call.1} parent=1 // pred_region
      _
    $region9: #{tpu_custom_call.1} parent=1 // pred_fallthru
      _
    // Predicated region
    $region10: #{tpu_custom_call.1} parent=1 // pred_check
      _
    $region11: #{tpu_custom_call.1} parent=1 // pred_check_branch
      %15 = sbr.rel (0) target = $region13
    $region12: #{tpu_custom_call.1} parent=1 // pred_region
      _
    $region13: #{tpu_custom_call.1} parent=1 // pred_fallthru
      _
    // Predicated region
    $region14: #{tpu_custom_call.1} parent=1 // pred_check
      _
    $region15: #{tpu_custom_call.1} parent=1 // pred_check_branch
      %17 = sbr.rel (0) target = $region17
    $region16: #{tpu_custom_call.1} parent=1 // pred_region
      _
    $region17: #{tpu_custom_call.1} parent=1 // pred_fallthru
      _
    %v18 = vld [vmem:[%s0] sm:$0xf]
    %v19 = vlaneseq
    %v20 = vand.u32 %v19, 127
    %21 = vset.pattern.permute.xlu0 0
    %22 = vperm.xlu0 %21, %v18
    %v23 = vpop.permute.xlu0 %22
    %vm24 = vcmp.eq.s32.totalorder %v23, %v20
    %v25 = vsel %vm24, 1, 0
    %v26 = vcvt.s32.f32 %v25
    %v27 = vld [vmem:[%s1] sm:$0xff]
    %v28 = vld [vmem:[%s1 + $0x8] sm:$0xff]
    %v29 = vld [vmem:[%s1 + $0x10] sm:$0xff]
    %v30 = vld [vmem:[%s1 + $0x18] sm:$0xff]
    %v31 = vld [vmem:[%s1 + $0x20] sm:$0xff]
    %v32 = vld [vmem:[%s1 + $0x28] sm:$0xff]
    %v33 = vld [vmem:[%s1 + $0x30] sm:$0xff]
    %v34 = vld [vmem:[%s1 + $0x38] sm:$0xff]
    %v35 = vld [vmem:[%s1 + $0x40] sm:$0xff]
    %v36 = vld [vmem:[%s1 + $0x48] sm:$0xff]
    %v37 = vld [vmem:[%s1 + $0x50] sm:$0xff]
    %v38 = vld [vmem:[%s1 + $0x58] sm:$0xff]
    %v39 = vld [vmem:[%s1 + $0x60] sm:$0xff]
    %v40 = vld [vmem:[%s1 + $0x68] sm:$0xff]
    %v41 = vld [vmem:[%s1 + $0x70] sm:$0xff]
    %v42 = vld [vmem:[%s1 + $0x78] sm:$0xff]
    %43 = vmatpush.msra.mxu0 %v42
    %44 = vmatpush.msra.mxu0 %v41
    %45 = vmatpush.msra.mxu0 %v40
    %46 = vmatpush.msra.mxu0 %v39
    %47 = vmatpush.msra.mxu0 %v38
    %48 = vmatpush.msra.mxu0 %v37
    %49 = vmatpush.msra.mxu0 %v36
    %50 = vmatpush.msra.mxu0 %v35
    %51 = vmatpush.msra.mxu0 %v34
    %52 = vmatpush.msra.mxu0 %v33
    %53 = vmatpush.msra.mxu0 %v32
    %54 = vmatpush.msra.mxu0 %v31
    %55 = vmatpush.msra.mxu0 %v30
    %56 = vmatpush.msra.mxu0 %v29
    %57 = vmatpush.msra.mxu0 %v28
    %58 = vmatpush.msra.mxu0 %v27
    %59 = vmatmul.f32.gmra.mxu0 %v26
    %v60 = vpop.f32.mrf.mxu0
    %v61 = vadd.f32 0.0, %v60
    %62 = vdwg.mxu0
    %v63 = vld [vmem:[%s2] sm:$0xff]
    %v64 = vld [vmem:[%s2 + $0x8] sm:$0xff]
    %v65 = vld [vmem:[%s2 + $0x10] sm:$0xff]
    %v66 = vld [vmem:[%s2 + $0x18] sm:$0xff]
    %v67 = vld [vmem:[%s2 + $0x20] sm:$0xff]
    %v68 = vld [vmem:[%s2 + $0x28] sm:$0xff]
    %v69 = vld [vmem:[%s2 + $0x30] sm:$0xff]
    %v70 = vld [vmem:[%s2 + $0x38] sm:$0xff]
    %v71 = vld [vmem:[%s2 + $0x40] sm:$0x3f]
    %v72 = vld [vmem:[%s3] sm:$0x1]
    %v74 = vperm.slane %v72, 0
    %vm76 = vcmask 572416
    %v78 = vsel %vm76, %v61, 0
    %vm80 = vcmask 1045504
    %v82 = vsel %vm80, %v71, 0
    %84 = vmatpush.msra.mxu0 0.0
    %85 = vmatpush.msra.mxu0 0.0
    %86 = vmatpush.msra.mxu0 0.0
    %87 = vmatpush.msra.mxu0 0.0
    %88 = vmatpush.msra.mxu0 0.0
    %89 = vmatpush.msra.mxu0 0.0
    %90 = vmatpush.msra.mxu0 0.0
    %91 = vmatpush.msra.mxu0 %v82
    %92 = vmatpush.msra.mxu0 %v70
    %93 = vmatpush.msra.mxu0 %v69
    %94 = vmatpush.msra.mxu0 %v68
    %95 = vmatpush.msra.mxu0 %v67
    %96 = vmatpush.msra.mxu0 %v66
    %97 = vmatpush.msra.mxu0 %v65
    %98 = vmatpush.msra.mxu0 %v64
    %99 = vmatpush.msra.mxu0 %v63
    %100 = vmatmul.f32.gmra.mxu0 %v78
    %v101 = vpop.f32.mrf.mxu0
    %v102 = vadd.f32 %v74, %v101
    %103 = vdwg.mxu0
    %vm104 = vcmask 1043456
    %v105 = vsel %vm104, %v102, -inf
    %v106 = vrot.slane %v105, 4
    %v107 = vmax.f32 %v105, %v106
    %v108 = vrot.slane %v107, 2
    %v109 = vmax.f32 %v107, %v108
    %v110 = vrot.slane %v109, 1
    %v111 = vmax.f32 %v109, %v110
    %v112 = vsub.f32 %v102, %v111
    %v113 = vmul.f32 %v112, 1.442695
    %v114 = vpow.pop %v113
    %v115 = vsel %vm104, %v114, 0.0
    %v116 = vrot.slane %v115, 4
    %v117 = vadd.f32 %v115, %v116
    %v118 = vrot.slane %v117, 2
    %v119 = vadd.f32 %v117, %v118
    %v120 = vrot.slane %v119, 1
    %v121 = vadd.f32 %v119, %v120
    %v122 = vlog2.pop %v121
    %v123 = vmul.f32 %v122, 0.6931472
    %v124 = vsub.f32 %v112, %v123
    %125 = vst [vmem:[#allocation2] sm:$0xf] %v124
    // Predicated region
    $region18: #{tpu_custom_call.1} parent=1 // pred_check
      _
    $region19: #{tpu_custom_call.1} parent=1 // pred_check_branch
      %127 = sbr.rel (0) target = $region21
    $region20: #{tpu_custom_call.1} parent=1 // pred_region
      %129 = vsyncadd [#allocation3], 0
      %s131 = sshll.u32 [#allocation2], 4
      %s132 = int_to_ptr.vmem [resolvable:$true] %s131
      %s133 = sshll.u32 %s4, 4
      %s134 = int_to_ptr.hbm [resolvable:$true] %s133
      %136 = dma.vmem_to_hbm [thread:$0]  %s132, 64, %s134, [#allocation3]
    $region21: #{tpu_custom_call.1} parent=1 // pred_fallthru
      _
    // Predicated region
    $region22: #{tpu_custom_call.1} parent=1 // pred_check
      _
    $region23: #{tpu_custom_call.1} parent=1 // pred_check_branch
      %138 = sbr.rel (0) target = $region25
    $region24: #{tpu_custom_call.1} parent=1 // pred_region
      %140 = dma.done [#allocation3], 64
    $region25: #{tpu_custom_call.1} parent=1 // pred_fallthru
      _
    %141 = vsyncpa [#allocation3], 1

</llo_original>
